<compile_context>
chip_gen: v6e
topology: v6e:2x2x1
jax: 0.10.0
libtpu: 0.0.40
codegen_flags: <defaults>
</compile_context>

<pallas_src>
import jax
import jax.numpy as jnp
from jax.experimental import pallas as pl
from jax.experimental.pallas import tpu as pltpu


# --------------------------------------------------------------------------
# Kernel
# --------------------------------------------------------------------------
def _make_decoder_kernel(num_layers):
    """Kernel ref order: (z, c, w0_z, w0_c, b0, [w_i, b_i]..., out)."""

    def kernel(*refs):
        z_ref, c_ref = refs[0], refs[1]
        out_ref = refs[-1]
        p = refs[2:-1]

        # Layer 0: split-K matmul instead of concatenating along the lane axis.
        h = (jnp.dot(z_ref[...], p[0][...], preferred_element_type=jnp.float32)
             + jnp.dot(c_ref[...], p[1][...], preferred_element_type=jnp.float32)
             + p[2][...])

        idx = 3
        for _ in range(1, num_layers):
            h = jnp.maximum(h, 0.0)                       # ReLU between layers
            w_ref, b_ref = p[idx], p[idx + 1]
            idx += 2
            h = jnp.dot(h.astype(w_ref.dtype), w_ref[...],
                        preferred_element_type=jnp.float32) + b_ref[...]

        # Sigmoid: exp on EUP + approximate reciprocal on EUP (frees the VPU).
        e = jnp.exp(-h)
        out_ref[...] = pl.reciprocal(1.0 + e, approx=True).astype(out_ref.dtype)

    return kernel


# --------------------------------------------------------------------------
# Wrapper helpers
# --------------------------------------------------------------------------
def _round_up(x, m):
    return ((x + m - 1) // m) * m


def _choose_tile(batch):
    """Auto batch-tile: single step for tiny batches, 128..512 otherwise,
    keeping >= 2 grid steps for larger batches (v7x megacore)."""
    if batch <= 128:
        return _round_up(batch, 16)          # one grid step over the whole batch
    half = _round_up((batch + 1) // 2, 16)   # >= 2 steps
    return max(128, min(512, half))


def _vmem_limit_bytes(flat_params, tm, dz, dc, dout, max_width,
                      single_buffer_weights):
    wmult = 1 if single_buffer_weights else 2
    wbytes = wmult * sum(int(a.size) * a.dtype.itemsize for a in flat_params)
    act_in = 2 * tm * (dz + dc) * 2          # double-buffered bf16 input tiles
    act_out = 2 * tm * dout * 4              # double-buffered output tiles (f32)
    h_bytes = tm * max_width * (4 + 2)       # f32 intermediate + bf16 cast copy
    need = wbytes + act_in + act_out + h_bytes
    try:
        cap = int(pltpu.get_tpu_info().vmem_capacity_bytes) - (16 << 20)
    except Exception:
        cap = 48 << 20                       # conservative (v7x = 64 MiB / TC)
    cap = max(cap, 16 << 20)
    return int(min(cap, max(16 << 20, int(1.5 * need))))


def _build_and_run(z, c, flat, num_layers, tm, dz, dc, dout, max_width,
                   out_dtype, single_buffer_weights):
    b_pad = z.shape[0]
    grid = (b_pad // tm,)

    in_specs = [
        pl.BlockSpec((tm, dz), lambda i: (i, 0)),
        pl.BlockSpec((tm, dc), lambda i: (i, 0)),
    ]
    for a in flat:
        if single_buffer_weights:
            # Constant index_map -> resident block; single-buffer it.
            in_specs.append(pl.BlockSpec(a.shape, lambda i: (0, 0),
                                         pipeline_mode=pl.Buffered(1)))
        else:
            in_specs.append(pl.BlockSpec(a.shape, lambda i: (0, 0)))
    out_specs = pl.BlockSpec((tm, dout), lambda i: (i, 0))

    return pl.pallas_call(
        _make_decoder_kernel(num_layers),
        out_shape=jax.ShapeDtypeStruct((b_pad, dout), out_dtype),
        grid=grid,
        in_specs=in_specs,
        out_specs=out_specs,
        compiler_params=pltpu.CompilerParams(
            dimension_semantics=("parallel",),
            vmem_limit_bytes=_vmem_limit_bytes(
                flat, tm, dz, dc, dout, max_width, single_buffer_weights),
        ),
    )(z, c, *flat)


def decoder_forward(z, c, params, *, tm=None, out_dtype=jnp.float32):
    """params = [(w0_z, w0_c, b0), (w1, b1), ...].
    Weights are (in_features, out_features) bf16 so the kernel computes
    x @ W + b; biases are (1, out_features) f32."""
    B = z.shape[0]
    dz, dc = z.shape[1], c.shape[1]
    dout = params[-1][0].shape[1]
    num_layers = len(params)
    flat = [a for layer in params for a in layer]
    max_width = max([dz + dc] + [w.shape[1] for layer in params
                                 for w in layer[:-1]])

    if tm is None:
        tm = _choose_tile(B)
    tm = max(8, _round_up(tm, 8))

    # Pad the batch only when needed (avoid an extra HBM pass otherwise).
    b_pad = _round_up(B, tm)
    if b_pad != B:
        pad = b_pad - B
        z = jnp.pad(z, ((0, pad), (0, 0)))
        c = jnp.pad(c, ((0, pad), (0, 0)))

    # Halve activation DMA traffic; matmuls still accumulate in f32.
    z = z.astype(jnp.bfloat16)
    c = c.astype(jnp.bfloat16)

    try:
        out = _build_and_run(z, c, flat, num_layers, tm, dz, dc, dout,
                             max_width, out_dtype, single_buffer_weights=True)
    except Exception:
        # Fallback if single-buffered pipeline_mode is rejected by this jaxlib.
        out = _build_and_run(z, c, flat, num_layers, tm, dz, dc, dout,
                             max_width, out_dtype, single_buffer_weights=False)
    return out[:B]


# --------------------------------------------------------------------------
# Pure-JAX reference (mirrors the kernel's bf16 casts)
# --------------------------------------------------------------------------
def decoder_reference(z, c, params):
    zf = z.astype(jnp.bfloat16).astype(jnp.float32)
    cf = c.astype(jnp.bfloat16).astype(jnp.float32)
    w0z, w0c, b0 = params[0]
    h = zf @ w0z.astype(jnp.float32) + cf @ w0c.astype(jnp.float32) + b0
    for (w, b) in params[1:]:
        h = jnp.maximum(h, 0.0)
        h = h.astype(jnp.bfloat16).astype(jnp.float32) @ w.astype(jnp.float32) + b
    return jax.nn.sigmoid(h)


def init_decoder_params(key, latent_size, att_size, layer_sizes):
    """nn.Linear-style init (U(-1/sqrt(in), 1/sqrt(in))), stored as (in, out).
    Layer 0's K axis is split into z-rows ([:latent_size]) and c-rows
    ([latent_size:]) matching torch.cat((z, c), dim=-1) ordering."""
    sizes = [latent_size + att_size] + list(layer_sizes)
    params = []
    for i, (din, dout) in enumerate(zip(sizes[:-1], sizes[1:])):
        key, kw = jax.random.split(key)
        bound = 1.0 / (din ** 0.5)
        w = jax.random.uniform(kw, (din, dout), jnp.float32, -bound, bound)
        b = jnp.zeros((1, dout), jnp.float32)
        if i == 0:
            params.append((w[:latent_size].astype(jnp.bfloat16),
                           w[latent_size:].astype(jnp.bfloat16), b))
        else:
            params.append((w.astype(jnp.bfloat16), b))
    return params


if __name__ == "__main__":
    # Small, lane-friendly config: latent=32, attSize=32, layer_sizes=[128, 256]
    B, LATENT, ATT = 16, 32, 32
    LAYER_SIZES = [128, 256]   # hidden (ReLU) -> output (Sigmoid)

    key = jax.random.PRNGKey(0)
    kz, kc, kp = jax.random.split(key, 3)
    z = jax.random.normal(kz, (B, LATENT), dtype=jnp.float32)
    c = jax.random.normal(kc, (B, ATT), dtype=jnp.float32)
    params = init_decoder_params(kp, LATENT, ATT, LAYER_SIZES)

    out = decoder_forward(z, c, params)     # auto tile: single grid step here
    out = jax.block_until_ready(out)

    ref = decoder_reference(z, c, params)
    assert out.shape == (B, LAYER_SIZES[-1]) and out.dtype == jnp.float32
    assert bool(jnp.all((out >= 0.0) & (out <= 1.0)))       # sigmoid range
    err = float(jnp.max(jnp.abs(out - ref)))
    assert bool(jnp.allclose(out, ref, atol=2e-2)), err
    print("KERNEL_OK")
</pallas_src>

<mosaic_0001>
module attributes {stable_mosaic.version = 11 : i64} {
  func.func @kernel(%arg0: i32, %arg1: memref<16x32xbf16, #tpu.memory_space<vmem>>, %arg2: memref<16x32xbf16, #tpu.memory_space<vmem>>, %arg3: memref<32x128xbf16, #tpu.memory_space<vmem>>, %arg4: memref<32x128xbf16, #tpu.memory_space<vmem>>, %arg5: memref<1x128xf32, #tpu.memory_space<vmem>>, %arg6: memref<128x256xbf16, #tpu.memory_space<vmem>>, %arg7: memref<1x256xf32, #tpu.memory_space<vmem>>, %arg8: memref<16x256xf32, #tpu.memory_space<vmem>>) attributes {dimension_semantics = [#tpu.dimension_semantics<parallel>], iteration_bounds = array<i64: 1>, scalar_prefetch = 0 : i64, scratch_operands = 0 : i64, tpu.core_type = #tpu.core_type<tc>, window_params = [{transform_indices = @transform_0, window_bounds = array<i64: 16, 32>}, {transform_indices = @transform_1, window_bounds = array<i64: 16, 32>}, {pipeline_mode = #tpu.pipeline_mode<synchronous>, transform_indices = @transform_2, window_bounds = array<i64: 32, 128>}, {pipeline_mode = #tpu.pipeline_mode<synchronous>, transform_indices = @transform_3, window_bounds = array<i64: 32, 128>}, {pipeline_mode = #tpu.pipeline_mode<synchronous>, transform_indices = @transform_4, window_bounds = array<i64: 1, 128>}, {pipeline_mode = #tpu.pipeline_mode<synchronous>, transform_indices = @transform_5, window_bounds = array<i64: 128, 256>}, {pipeline_mode = #tpu.pipeline_mode<synchronous>, transform_indices = @transform_6, window_bounds = array<i64: 1, 256>}, {transform_indices = @transform_7, window_bounds = array<i64: 16, 256>}]} {
    %c0 = arith.constant 0 : index
    %c0_0 = arith.constant 0 : index
    %0 = vector.load %arg1[%c0, %c0_0] : memref<16x32xbf16, #tpu.memory_space<vmem>>, vector<16x32xbf16>
    %c0_1 = arith.constant 0 : index
    %c0_2 = arith.constant 0 : index
    %1 = vector.load %arg3[%c0_1, %c0_2] : memref<32x128xbf16, #tpu.memory_space<vmem>>, vector<32x128xbf16>
    %cst = arith.constant dense<0.000000e+00> : vector<16x128xf32>
    %2 = tpu.matmul %0, %1, %cst {dimension_numbers = #tpu.dot_dimension_numbers<[1], [0], [0], [1], [0, 0, 1, 1], [], []>} : vector<16x32xbf16>, vector<32x128xbf16>, vector<16x128xf32> -> vector<16x128xf32>
    %c0_3 = arith.constant 0 : index
    %c0_4 = arith.constant 0 : index
    %3 = vector.load %arg2[%c0_3, %c0_4] : memref<16x32xbf16, #tpu.memory_space<vmem>>, vector<16x32xbf16>
    %c0_5 = arith.constant 0 : index
    %c0_6 = arith.constant 0 : index
    %4 = vector.load %arg4[%c0_5, %c0_6] : memref<32x128xbf16, #tpu.memory_space<vmem>>, vector<32x128xbf16>
    %cst_7 = arith.constant dense<0.000000e+00> : vector<16x128xf32>
    %5 = tpu.matmul %3, %4, %cst_7 {dimension_numbers = #tpu.dot_dimension_numbers<[1], [0], [0], [1], [0, 0, 1, 1], [], []>} : vector<16x32xbf16>, vector<32x128xbf16>, vector<16x128xf32> -> vector<16x128xf32>
    %6 = arith.addf %2, %5 : vector<16x128xf32>
    %c0_8 = arith.constant 0 : index
    %c0_9 = arith.constant 0 : index
    %7 = vector.load %arg5[%c0_8, %c0_9] : memref<1x128xf32, #tpu.memory_space<vmem>>, vector<1x128xf32>
    %8 = vector.broadcast %7 : vector<1x128xf32> to vector<16x128xf32>
    %9 = arith.addf %6, %8 : vector<16x128xf32>
    %cst_10 = arith.constant 0.000000e+00 : f32
    %10 = vector.broadcast %cst_10 : f32 to vector<16x128xf32>
    %11 = arith.maximumf %9, %10 : vector<16x128xf32>
    %12 = arith.truncf %11 : vector<16x128xf32> to vector<16x128xbf16>
    %c0_11 = arith.constant 0 : index
    %c0_12 = arith.constant 0 : index
    %13 = vector.load %arg6[%c0_11, %c0_12] : memref<128x256xbf16, #tpu.memory_space<vmem>>, vector<128x256xbf16>
    %cst_13 = arith.constant dense<0.000000e+00> : vector<16x256xf32>
    %14 = tpu.matmul %12, %13, %cst_13 {dimension_numbers = #tpu.dot_dimension_numbers<[1], [0], [0], [1], [0, 0, 1, 1], [], []>} : vector<16x128xbf16>, vector<128x256xbf16>, vector<16x256xf32> -> vector<16x256xf32>
    %c0_14 = arith.constant 0 : index
    %c0_15 = arith.constant 0 : index
    %15 = vector.load %arg7[%c0_14, %c0_15] : memref<1x256xf32, #tpu.memory_space<vmem>>, vector<1x256xf32>
    %16 = vector.broadcast %15 : vector<1x256xf32> to vector<16x256xf32>
    %17 = arith.addf %14, %16 : vector<16x256xf32>
    %cst_16 = arith.constant 0.000000e+00 : f32
    %18 = vector.broadcast %cst_16 : f32 to vector<16x256xf32>
    %19 = arith.subf %18, %17 : vector<16x256xf32>
    %20 = math.exp %19 : vector<16x256xf32>
    %cst_17 = arith.constant 1.000000e+00 : f32
    %21 = vector.broadcast %cst_17 : f32 to vector<16x256xf32>
    %22 = arith.addf %21, %20 : vector<16x256xf32>
    %23 = tpu.reciprocal %22 {approx = true} : vector<16x256xf32> -> vector<16x256xf32>
    %c0_18 = arith.constant 0 : index
    %c0_19 = arith.constant 0 : index
    %24 = vector.load %arg8[%c0_18, %c0_19] : memref<16x256xf32, #tpu.memory_space<vmem>>, vector<16x256xf32>
    tpu.vector_store %arg8[%c0_18, %c0_19], %23 {strides = array<i32>} : memref<16x256xf32, #tpu.memory_space<vmem>>, vector<16x256xf32>,
    return
  }
  func.func @transform_0(%arg0: i32) -> (i32, i32) {
    %c0_i32 = arith.constant 0 : i32
    %c0_i32_0 = arith.constant 0 : i32
    return %arg0, %c0_i32 : i32, i32
  }
  func.func @transform_1(%arg0: i32) -> (i32, i32) {
    %c0_i32 = arith.constant 0 : i32
    %c0_i32_0 = arith.constant 0 : i32
    return %arg0, %c0_i32 : i32, i32
  }
  func.func @transform_2(%arg0: i32) -> (i32, i32) {
    %c0_i32 = arith.constant 0 : i32
    %c0_i32_0 = arith.constant 0 : i32
    %c0_i32_1 = arith.constant 0 : i32
    return %c0_i32, %c0_i32_0 : i32, i32
  }
  func.func @transform_3(%arg0: i32) -> (i32, i32) {
    %c0_i32 = arith.constant 0 : i32
    %c0_i32_0 = arith.constant 0 : i32
    %c0_i32_1 = arith.constant 0 : i32
    return %c0_i32, %c0_i32_0 : i32, i32
  }
  func.func @transform_4(%arg0: i32) -> (i32, i32) {
    %c0_i32 = arith.constant 0 : i32
    %c0_i32_0 = arith.constant 0 : i32
    %c0_i32_1 = arith.constant 0 : i32
    return %c0_i32, %c0_i32_0 : i32, i32
  }
  func.func @transform_5(%arg0: i32) -> (i32, i32) {
    %c0_i32 = arith.constant 0 : i32
    %c0_i32_0 = arith.constant 0 : i32
    %c0_i32_1 = arith.constant 0 : i32
    return %c0_i32, %c0_i32_0 : i32, i32
  }
  func.func @transform_6(%arg0: i32) -> (i32, i32) {
    %c0_i32 = arith.constant 0 : i32
    %c0_i32_0 = arith.constant 0 : i32
    %c0_i32_1 = arith.constant 0 : i32
    return %c0_i32, %c0_i32_0 : i32, i32
  }
  func.func @transform_7(%arg0: i32) -> (i32, i32) {
    %c0_i32 = arith.constant 0 : i32
    %c0_i32_0 = arith.constant 0 : i32
    return %arg0, %c0_i32 : i32, i32
  }
}

module attributes {stable_mosaic.version = 11 : i64} {
  func.func @kernel(%arg0: i32, %arg1: memref<16x32xbf16, #tpu.memory_space<vmem>>, %arg2: memref<16x32xbf16, #tpu.memory_space<vmem>>, %arg3: memref<32x128xbf16, #tpu.memory_space<vmem>>, %arg4: memref<32x128xbf16, #tpu.memory_space<vmem>>, %arg5: memref<1x128xf32, #tpu.memory_space<vmem>>, %arg6: memref<128x256xbf16, #tpu.memory_space<vmem>>, %arg7: memref<1x256xf32, #tpu.memory_space<vmem>>, %arg8: memref<16x256xf32, #tpu.memory_space<vmem>>) attributes {dimension_semantics = [#tpu.dimension_semantics<parallel>], iteration_bounds = array<i64: 1>, scalar_prefetch = 0 : i64, scratch_operands = 0 : i64, tpu.core_type = #tpu.core_type<tc>, window_params = [{transform_indices = @transform_0, window_bounds = array<i64: 16, 32>}, {transform_indices = @transform_1, window_bounds = array<i64: 16, 32>}, {pipeline_mode = #tpu.pipeline_mode<synchronous>, transform_indices = @transform_2, window_bounds = array<i64: 32, 128>}, {pipeline_mode = #tpu.pipeline_mode<synchronous>, transform_indices = @transform_3, window_bounds = array<i64: 32, 128>}, {pipeline_mode = #tpu.pipeline_mode<synchronous>, transform_indices = @transform_4, window_bounds = array<i64: 1, 128>}, {pipeline_mode = #tpu.pipeline_mode<synchronous>, transform_indices = @transform_5, window_bounds = array<i64: 128, 256>}, {pipeline_mode = #tpu.pipeline_mode<synchronous>, transform_indices = @transform_6, window_bounds = array<i64: 1, 256>}, {transform_indices = @transform_7, window_bounds = array<i64: 16, 256>}]} {
    %c0 = arith.constant 0 : index
    %c0_0 = arith.constant 0 : index
    %0 = vector.load %arg1[%c0, %c0_0] : memref<16x32xbf16, #tpu.memory_space<vmem>>, vector<16x32xbf16>
    %c0_1 = arith.constant 0 : index
    %c0_2 = arith.constant 0 : index
    %1 = vector.load %arg3[%c0_1, %c0_2] : memref<32x128xbf16, #tpu.memory_space<vmem>>, vector<32x128xbf16>
    %cst = arith.constant dense<0.000000e+00> : vector<16x128xf32>
    %2 = tpu.matmul %0, %1, %cst {dimension_numbers = #tpu.dot_dimension_numbers<[1], [0], [0], [1], [0, 0, 1, 1], [], []>} : vector<16x32xbf16>, vector<32x128xbf16>, vector<16x128xf32> -> vector<16x128xf32>
    %c0_3 = arith.constant 0 : index
    %c0_4 = arith.constant 0 : index
    %3 = vector.load %arg2[%c0_3, %c0_4] : memref<16x32xbf16, #tpu.memory_space<vmem>>, vector<16x32xbf16>
    %c0_5 = arith.constant 0 : index
    %c0_6 = arith.constant 0 : index
    %4 = vector.load %arg4[%c0_5, %c0_6] : memref<32x128xbf16, #tpu.memory_space<vmem>>, vector<32x128xbf16>
    %cst_7 = arith.constant dense<0.000000e+00> : vector<16x128xf32>
    %5 = tpu.matmul %3, %4, %cst_7 {dimension_numbers = #tpu.dot_dimension_numbers<[1], [0], [0], [1], [0, 0, 1, 1], [], []>} : vector<16x32xbf16>, vector<32x128xbf16>, vector<16x128xf32> -> vector<16x128xf32>
    %6 = arith.addf %2, %5 : vector<16x128xf32>
    %c0_8 = arith.constant 0 : index
    %c0_9 = arith.constant 0 : index
    %7 = vector.load %arg5[%c0_8, %c0_9] : memref<1x128xf32, #tpu.memory_space<vmem>>, vector<1x128xf32>
    %8 = vector.broadcast %7 : vector<1x128xf32> to vector<16x128xf32>
    %9 = arith.addf %6, %8 : vector<16x128xf32>
    %cst_10 = arith.constant 0.000000e+00 : f32
    %10 = vector.broadcast %cst_10 : f32 to vector<16x128xf32>
    %11 = arith.maximumf %9, %10 : vector<16x128xf32>
    %12 = arith.truncf %11 : vector<16x128xf32> to vector<16x128xbf16>
    %c0_11 = arith.constant 0 : index
    %c0_12 = arith.constant 0 : index
    %13 = vector.load %arg6[%c0_11, %c0_12] : memref<128x256xbf16, #tpu.memory_space<vmem>>, vector<128x256xbf16>
    %cst_13 = arith.constant dense<0.000000e+00> : vector<16x256xf32>
    %14 = tpu.matmul %12, %13, %cst_13 {dimension_numbers = #tpu.dot_dimension_numbers<[1], [0], [0], [1], [0, 0, 1, 1], [], []>} : vector<16x128xbf16>, vector<128x256xbf16>, vector<16x256xf32> -> vector<16x256xf32>
    %c0_14 = arith.constant 0 : index
    %c0_15 = arith.constant 0 : index
    %15 = vector.load %arg7[%c0_14, %c0_15] : memref<1x256xf32, #tpu.memory_space<vmem>>, vector<1x256xf32>
    %16 = vector.broadcast %15 : vector<1x256xf32> to vector<16x256xf32>
    %17 = arith.addf %14, %16 : vector<16x256xf32>
    %cst_16 = arith.constant 0.000000e+00 : f32
    %18 = vector.broadcast %cst_16 : f32 to vector<16x256xf32>
    %19 = arith.subf %18, %17 : vector<16x256xf32>
    %20 = math.exp %19 : vector<16x256xf32>
    %cst_17 = arith.constant 1.000000e+00 : f32
    %21 = vector.broadcast %cst_17 : f32 to vector<16x256xf32>
    %22 = arith.addf %21, %20 : vector<16x256xf32>
    %23 = tpu.reciprocal %22 {approx = true} : vector<16x256xf32> -> vector<16x256xf32>
    %c0_18 = arith.constant 0 : index
    %c0_19 = arith.constant 0 : index
    %24 = vector.load %arg8[%c0_18, %c0_19] : memref<16x256xf32, #tpu.memory_space<vmem>>, vector<16x256xf32>
    tpu.vector_store %arg8[%c0_18, %c0_19], %23 {strides = array<i32>} : memref<16x256xf32, #tpu.memory_space<vmem>>, vector<16x256xf32>,
    return
  }
  func.func @transform_0(%arg0: i32) -> (i32, i32) {
    %c0_i32 = arith.constant 0 : i32
    %c0_i32_0 = arith.constant 0 : i32
    return %arg0, %c0_i32 : i32, i32
  }
  func.func @transform_1(%arg0: i32) -> (i32, i32) {
    %c0_i32 = arith.constant 0 : i32
    %c0_i32_0 = arith.constant 0 : i32
    return %arg0, %c0_i32 : i32, i32
  }
  func.func @transform_2(%arg0: i32) -> (i32, i32) {
    %c0_i32 = arith.constant 0 : i32
    %c0_i32_0 = arith.constant 0 : i32
    %c0_i32_1 = arith.constant 0 : i32
    return %c0_i32, %c0_i32_0 : i32, i32
  }
  func.func @transform_3(%arg0: i32) -> (i32, i32) {
    %c0_i32 = arith.constant 0 : i32
    %c0_i32_0 = arith.constant 0 : i32
    %c0_i32_1 = arith.constant 0 : i32
    return %c0_i32, %c0_i32_0 : i32, i32
  }
  func.func @transform_4(%arg0: i32) -> (i32, i32) {
    %c0_i32 = arith.constant 0 : i32
    %c0_i32_0 = arith.constant 0 : i32
    %c0_i32_1 = arith.constant 0 : i32
    return %c0_i32, %c0_i32_0 : i32, i32
  }
  func.func @transform_5(%arg0: i32) -> (i32, i32) {
    %c0_i32 = arith.constant 0 : i32
    %c0_i32_0 = arith.constant 0 : i32
    %c0_i32_1 = arith.constant 0 : i32
    return %c0_i32, %c0_i32_0 : i32, i32
  }
  func.func @transform_6(%arg0: i32) -> (i32, i32) {
    %c0_i32 = arith.constant 0 : i32
    %c0_i32_0 = arith.constant 0 : i32
    %c0_i32_1 = arith.constant 0 : i32
    return %c0_i32, %c0_i32_0 : i32, i32
  }
  func.func @transform_7(%arg0: i32) -> (i32, i32) {
    %c0_i32 = arith.constant 0 : i32
    %c0_i32_0 = arith.constant 0 : i32
    return %arg0, %c0_i32 : i32, i32
  }
}

</mosaic_0001>

<llo_original>
// kernel: tpu_custom_call.1
$region0: #{tpu_custom_call.1}
  #allocation0 [shape = 'u32[]', space=smem, size = 0x4, offset = 0x4, fixed_abs, tag = 'smem constant byte address 0x4 - core index']
  #allocation1 [shape = 'u32[144,128]{1,0:T(1,128)}', space=vmem, size = 0x12000, scoped, tag = 'internal scratch']
  %s0 = inlined_call_operand.hbm [shape: bf16[16,32], index: 0, kind: input, shape index: {}]
  %s1 = inlined_call_operand.hbm [shape: bf16[16,32], index: 1, kind: input, shape index: {}]
  %s2 = inlined_call_operand.hbm [shape: bf16[32,128], index: 2, kind: input, shape index: {}]
  %s3 = inlined_call_operand.hbm [shape: bf16[32,128], index: 3, kind: input, shape index: {}]
  %s4 = inlined_call_operand.vmem [shape: f32[1,128], index: 4, kind: input, shape index: {}]
  %s5 = inlined_call_operand.hbm [shape: bf16[128,256], index: 5, kind: input, shape index: {}]
  %s6 = inlined_call_operand.vmem [shape: f32[1,256], index: 6, kind: input, shape index: {}]
  %s7 = inlined_call_operand.hbm [shape: f32[16,256], index: 7, kind: output, shape index: {}]
  %s8 = sld [smem:[#allocation0]]
  $region58: #{tpu_custom_call.1} parent=0
    _
  %s10 = ssub.s32 1, %s8
  %s11 = scalar_select 0, %s10, %s8
  $region1: #{tpu_custom_call.1} parent=0
    #allocation2 [shape = 'u8[4096]{0}', space=vmem, size = 0x1000, scoped, tag = 'input window, operand 0, single buffered']
    #allocation3 [shape = 's32[1]{0}', space=sflag, size = 0x4, scoped, tag = 'scoped memory for tpu_custom_call.1']
    #allocation4 [shape = 's32[1]{0}', space=sflag, size = 0x4, scoped, tag = 'scoped memory for tpu_custom_call.1']
    #allocation5 [shape = 'u8[4096]{0}', space=vmem, size = 0x1000, scoped, tag = 'input window, operand 1, single buffered']
    #allocation6 [shape = 's32[1]{0}', space=sflag, size = 0x4, scoped, tag = 'scoped memory for tpu_custom_call.1']
    #allocation7 [shape = 'u8[8192]{0}', space=vmem, size = 0x2000, scoped, tag = 'input window, operand 2, single buffered']
    #allocation8 [shape = 'u8[8192]{0}', space=vmem, size = 0x2000, scoped, tag = 'input window, operand 3, single buffered']
    #allocation9 [shape = 's32[1]{0}', space=sflag, size = 0x4, scoped, tag = 'scoped memory for tpu_custom_call.1']
    #allocation10 [shape = 'u8[65536]{0}', space=vmem, size = 0x10000, scoped, tag = 'input window, operand 5, single buffered']
    #allocation11 [shape = 'u8[16384]{0}', space=vmem, size = 0x4000, scoped, tag = 'output window, operand 0, single buffered']
    %12 = vsyncpa [#allocation3], 0
    %13 = vsyncpa [#allocation6], 0
    %14 = vsyncpa [#allocation9], 0
    %15 = vsyncpa [#allocation4], 0
    // Predicated region
    $region2: #{tpu_custom_call.1} parent=1 // pred_check
      _
    $region3: #{tpu_custom_call.1} parent=1 // pred_check_branch
      %17 = sbr.rel (0) target = $region5
    $region4: #{tpu_custom_call.1} parent=1 // pred_region
      %s19 = ssub.s32 128, 128
      %20 = vsyncadd [#allocation3], %s19
      %s21 = sshll.u32 [#allocation2], 4
      %s22 = int_to_ptr.vmem [resolvable:$true] %s21
      %27 = dma.hbm_to_vmem [thread:$0]  %s0, 128, %s22, [#allocation3], 64, 64, 4
    $region5: #{tpu_custom_call.1} parent=1 // pred_fallthru
      _
    // Predicated region
    $region6: #{tpu_custom_call.1} parent=1 // pred_check
      _
    $region7: #{tpu_custom_call.1} parent=1 // pred_check_branch
      %29 = sbr.rel (0) target = $region9
    $region8: #{tpu_custom_call.1} parent=1 // pred_region
      %s31 = ssub.s32 128, 128
      %32 = vsyncadd [#allocation6], %s31
      %s33 = sshll.u32 [#allocation5], 4
      %s34 = int_to_ptr.vmem [resolvable:$true] %s33
      %39 = dma.hbm_to_vmem [thread:$0]  %s1, 128, %s34, [#allocation6], 64, 64, 4
    $region9: #{tpu_custom_call.1} parent=1 // pred_fallthru
      _
    // Predicated region
    $region10: #{tpu_custom_call.1} parent=1 // pred_check
      _
    $region11: #{tpu_custom_call.1} parent=1 // pred_check_branch
      %41 = sbr.rel (0) target = $region13
    $region12: #{tpu_custom_call.1} parent=1 // pred_region
      %s43 = ssub.s32 256, 256
      %44 = vsyncadd [#allocation6], %s43
      %s45 = sshll.u32 [#allocation7], 4
      %s46 = int_to_ptr.vmem [resolvable:$true] %s45
      %51 = dma.hbm_to_vmem [thread:$0]  %s2, 256, %s46, [#allocation6], 64, 64, 4
    $region13: #{tpu_custom_call.1} parent=1 // pred_fallthru
      _
    // Predicated region
    $region14: #{tpu_custom_call.1} parent=1 // pred_check
      _
    $region15: #{tpu_custom_call.1} parent=1 // pred_check_branch
      %53 = sbr.rel (0) target = $region17
    $region16: #{tpu_custom_call.1} parent=1 // pred_region
      %s55 = ssub.s32 256, 256
      %56 = vsyncadd [#allocation9], %s55
      %s57 = sshll.u32 [#allocation8], 4
      %s58 = int_to_ptr.vmem [resolvable:$true] %s57
      %63 = dma.hbm_to_vmem [thread:$0]  %s3, 256, %s58, [#allocation9], 64, 64, 4
    $region17: #{tpu_custom_call.1} parent=1 // pred_fallthru
      _
    // Predicated region
    $region18: #{tpu_custom_call.1} parent=1 // pred_check
      _
    $region19: #{tpu_custom_call.1} parent=1 // pred_check_branch
      %65 = sbr.rel (0) target = $region21
    $region20: #{tpu_custom_call.1} parent=1 // pred_region
      _
    $region21: #{tpu_custom_call.1} parent=1 // pred_fallthru
      _
    // Predicated region
    $region22: #{tpu_custom_call.1} parent=1 // pred_check
      _
    $region23: #{tpu_custom_call.1} parent=1 // pred_check_branch
      %67 = sbr.rel (0) target = $region25
    $region24: #{tpu_custom_call.1} parent=1 // pred_region
      %s69 = ssub.s32 2048, 2048
      %70 = vsyncadd [#allocation9], %s69
      %s71 = sshll.u32 [#allocation10], 4
      %s72 = int_to_ptr.vmem [resolvable:$true] %s71
      %77 = dma.hbm_to_vmem [thread:$0]  %s5, 2048, %s72, [#allocation9], 128, 128, 8
    $region25: #{tpu_custom_call.1} parent=1 // pred_fallthru
      _
    // Predicated region
    $region26: #{tpu_custom_call.1} parent=1 // pred_check
      _
    $region27: #{tpu_custom_call.1} parent=1 // pred_check_branch
      %79 = sbr.rel (0) target = $region29
    $region28: #{tpu_custom_call.1} parent=1 // pred_region
      _
    $region29: #{tpu_custom_call.1} parent=1 // pred_fallthru
      _
    // Predicated region
    $region30: #{tpu_custom_call.1} parent=1 // pred_check
      _
    $region31: #{tpu_custom_call.1} parent=1 // pred_check_branch
      %81 = sbr.rel (0) target = $region33
    $region32: #{tpu_custom_call.1} parent=1 // pred_region
      %82 = dma.done [#allocation3], 128
    $region33: #{tpu_custom_call.1} parent=1 // pred_fallthru
      _
    // Predicated region
    $region34: #{tpu_custom_call.1} parent=1 // pred_check
      _
    $region35: #{tpu_custom_call.1} parent=1 // pred_check_branch
      %84 = sbr.rel (0) target = $region37
    $region36: #{tpu_custom_call.1} parent=1 // pred_region
      %85 = dma.done [#allocation6], 128
    $region37: #{tpu_custom_call.1} parent=1 // pred_fallthru
      _
    // Predicated region
    $region38: #{tpu_custom_call.1} parent=1 // pred_check
      _
    $region39: #{tpu_custom_call.1} parent=1 // pred_check_branch
      %87 = sbr.rel (0) target = $region41
    $region40: #{tpu_custom_call.1} parent=1 // pred_region
      %88 = dma.done [#allocation6], 256
    $region41: #{tpu_custom_call.1} parent=1 // pred_fallthru
      _
    // Predicated region
    $region42: #{tpu_custom_call.1} parent=1 // pred_check
      _
    $region43: #{tpu_custom_call.1} parent=1 // pred_check_branch
      %90 = sbr.rel (0) target = $region45
    $region44: #{tpu_custom_call.1} parent=1 // pred_region
      %91 = dma.done [#allocation9], 256
    $region45: #{tpu_custom_call.1} parent=1 // pred_fallthru
      _
    // Predicated region
    $region46: #{tpu_custom_call.1} parent=1 // pred_check
      _
    $region47: #{tpu_custom_call.1} parent=1 // pred_check_branch
      %93 = sbr.rel (0) target = $region49
    $region48: #{tpu_custom_call.1} parent=1 // pred_region
      %94 = dma.done [#allocation9], 2048
    $region49: #{tpu_custom_call.1} parent=1 // pred_fallthru
      _
    %v96 = vld [vmem:[#allocation2] sm:$0xf]
    %v97 = vld [vmem:[#allocation2 + $0x4] sm:$0xf]
    %v98 = vld [vmem:[#allocation7] sm:$0xf]
    %v99 = vld [vmem:[#allocation7 + $0x4] sm:$0xf]
    %v100 = vld [vmem:[#allocation7 + $0x8] sm:$0xf]
    %v101 = vld [vmem:[#allocation7 + $0xc] sm:$0xf]
    %v102 = vld [vmem:[#allocation5] sm:$0xf]
    %v103 = vld [vmem:[#allocation5 + $0x4] sm:$0xf]
    %v104 = vld [vmem:[#allocation8] sm:$0xf]
    %v105 = vld [vmem:[#allocation8 + $0x4] sm:$0xf]
    %v106 = vld [vmem:[#allocation8 + $0x8] sm:$0xf]
    %v107 = vld [vmem:[#allocation8 + $0xc] sm:$0xf]
    %v110 = vunpack.c.l.b16 %v102
    %v111 = vunpack.c.l.b16 %v103
    %v112 = vpack.c.b16 %v111, %v110
    %v117 = vunpack.c.l.b16 %v104
    %v118 = vunpack.c.l.b16 %v105
    %v119 = vunpack.c.l.b16 %v106
    %v120 = vunpack.c.l.b16 %v107
    %v121 = vpack.c.b16 %v118, %v117
    %v122 = vpack.c.b16 %v120, %v119
    %vm125 = vcmask 261120
    %v127 = vsel %vm125, %v112, 0
    %129 = vmatprep.subr.bf16.mxu0 0
    %130 = vmatpush1.bf16.msra.mxu0 0
    %131 = vmatprep.subr.bf16.mxu0 0
    %132 = vmatpush1.bf16.msra.mxu0 0
    %133 = vmatprep.subr.bf16.mxu0 0
    %134 = vmatpush1.bf16.msra.mxu0 0
    %135 = vmatprep.subr.bf16.mxu0 0
    %136 = vmatpush1.bf16.msra.mxu0 0
    %137 = vmatprep.subr.bf16.mxu0 0
    %138 = vmatpush1.bf16.msra.mxu0 0
    %139 = vmatprep.subr.bf16.mxu0 0
    %140 = vmatpush1.bf16.msra.mxu0 0
    %141 = vmatprep.subr.bf16.mxu0 0
    %142 = vmatpush1.bf16.msra.mxu0 %v122
    %143 = vmatprep.subr.bf16.mxu0 0
    %144 = vmatpush1.bf16.msra.mxu0 %v121
    %145 = vmatprep.subr.bf16.mxu0 0
    %146 = vmatpush2.bf16.msra.mxu0 0
    %147 = vmatprep.subr.bf16.mxu0 0
    %148 = vmatpush2.bf16.msra.mxu0 0
    %149 = vmatprep.subr.bf16.mxu0 0
    %150 = vmatpush2.bf16.msra.mxu0 0
    %151 = vmatprep.subr.bf16.mxu0 0
    %152 = vmatpush2.bf16.msra.mxu0 0
    %153 = vmatprep.subr.bf16.mxu0 0
    %154 = vmatpush2.bf16.msra.mxu0 0
    %155 = vmatprep.subr.bf16.mxu0 0
    %156 = vmatpush2.bf16.msra.mxu0 0
    %157 = vmatprep.subr.bf16.mxu0 0
    %158 = vmatpush2.bf16.msra.mxu0 0
    %159 = vmatprep.subr.bf16.mxu0 0
    %160 = vmatpush2.bf16.msra.mxu0 0
    %161 = vmatprep.mubr.bf16.mxu0 0
    %162 = vmatmul.mubr.bf16.gmra.mxu0 %v127
    %v163 = vpop.f32.mrf.mxu0
    %v164 = vadd.f32 0.0, %v163
    %v165 = vpop.f32.mrf.mxu0
    %v166 = vpop.f32.mrf.mxu0
    %v167 = vadd.f32 0.0, %v166
    %v168 = vpop.f32.mrf.mxu0
    %169 = vdwg.mxu0
    %v172 = vunpack.c.l.b16 %v96
    %v173 = vunpack.c.l.b16 %v97
    %v174 = vpack.c.b16 %v173, %v172
    %v179 = vunpack.c.l.b16 %v98
    %v180 = vunpack.c.l.b16 %v99
    %v181 = vunpack.c.l.b16 %v100
    %v182 = vunpack.c.l.b16 %v101
    %v183 = vpack.c.b16 %v180, %v179
    %v184 = vpack.c.b16 %v182, %v181
    %v188 = vsel %vm125, %v174, 0
    %190 = vmatprep.subr.bf16.mxu0 0
    %191 = vmatpush1.bf16.msra.mxu0 0
    %192 = vmatprep.subr.bf16.mxu0 0
    %193 = vmatpush1.bf16.msra.mxu0 0
    %194 = vmatprep.subr.bf16.mxu0 0
    %195 = vmatpush1.bf16.msra.mxu0 0
    %196 = vmatprep.subr.bf16.mxu0 0
    %197 = vmatpush1.bf16.msra.mxu0 0
    %198 = vmatprep.subr.bf16.mxu0 0
    %199 = vmatpush1.bf16.msra.mxu0 0
    %200 = vmatprep.subr.bf16.mxu0 0
    %201 = vmatpush1.bf16.msra.mxu0 0
    %202 = vmatprep.subr.bf16.mxu0 0
    %203 = vmatpush1.bf16.msra.mxu0 %v184
    %204 = vmatprep.subr.bf16.mxu0 0
    %205 = vmatpush1.bf16.msra.mxu0 %v183
    %206 = vmatprep.subr.bf16.mxu0 0
    %207 = vmatpush2.bf16.msra.mxu0 0
    %208 = vmatprep.subr.bf16.mxu0 0
    %209 = vmatpush2.bf16.msra.mxu0 0
    %210 = vmatprep.subr.bf16.mxu0 0
    %211 = vmatpush2.bf16.msra.mxu0 0
    %212 = vmatprep.subr.bf16.mxu0 0
    %213 = vmatpush2.bf16.msra.mxu0 0
    %214 = vmatprep.subr.bf16.mxu0 0
    %215 = vmatpush2.bf16.msra.mxu0 0
    %216 = vmatprep.subr.bf16.mxu0 0
    %217 = vmatpush2.bf16.msra.mxu0 0
    %218 = vmatprep.subr.bf16.mxu0 0
    %219 = vmatpush2.bf16.msra.mxu0 0
    %220 = vmatprep.subr.bf16.mxu0 0
    %221 = vmatpush2.bf16.msra.mxu0 0
    %222 = vmatprep.mubr.bf16.mxu0 0
    %223 = vmatmul.mubr.bf16.gmra.mxu0 %v188
    %v224 = vpop.f32.mrf.mxu0
    %v225 = vadd.f32 %v164, %v224
    %v226 = vpop.f32.mrf.mxu0
    %v227 = vpop.f32.mrf.mxu0
    %v228 = vadd.f32 %v167, %v227
    %v229 = vpop.f32.mrf.mxu0
    %230 = vdwg.mxu0
    %v231 = vld [vmem:[%s4] sm:$0x1]
    %v233 = vlaneseq
    %v234 = vshrl.u32 %v233, 7
    %v235 = vsub.s32 0, %v234
    %v236 = vrot.slane %v231, %v235
    %v238 = vadd.f32 %v225, %v236
    %v239 = vadd.f32 %v228, %v236
    %v240 = vmax.f32 %v238, 0.0
    %v241 = vmax.f32 %v239, 0.0
    %v242 = vpack.c.bf16 %v241, %v240
    %v243 = vld [vmem:[#allocation10] sm:$0xff]
    %v244 = vld [vmem:[#allocation10 + $0x8] sm:$0xff]
    %v245 = vld [vmem:[#allocation10 + $0x10] sm:$0xff]
    %v246 = vld [vmem:[#allocation10 + $0x18] sm:$0xff]
    %v247 = vld [vmem:[#allocation10 + $0x20] sm:$0xff]
    %v248 = vld [vmem:[#allocation10 + $0x28] sm:$0xff]
    %v249 = vld [vmem:[#allocation10 + $0x30] sm:$0xff]
    %v250 = vld [vmem:[#allocation10 + $0x38] sm:$0xff]
    %v251 = vld [vmem:[#allocation10 + $0x40] sm:$0xff]
    %v252 = vld [vmem:[#allocation10 + $0x48] sm:$0xff]
    %v253 = vld [vmem:[#allocation10 + $0x50] sm:$0xff]
    %v254 = vld [vmem:[#allocation10 + $0x58] sm:$0xff]
    %v255 = vld [vmem:[#allocation10 + $0x60] sm:$0xff]
    %v256 = vld [vmem:[#allocation10 + $0x68] sm:$0xff]
    %v257 = vld [vmem:[#allocation10 + $0x70] sm:$0xff]
    %v258 = vld [vmem:[#allocation10 + $0x78] sm:$0xff]
    %v259 = vld [vmem:[%s6] sm:$0x3]
    %v261 = vlaneseq
    %v262 = vshrl.u32 %v261, 7
    %v263 = vsub.s32 0, %v262
    %v264 = vrot.slane %v259, %v263
    %v265 = vlaneseq
    %v266 = vshrl.u32 %v265, 7
    %v267 = vsub.s32 1, %v266
    %v268 = vrot.slane %v259, %v267
    %v287 = vunpack.c.l.b16 %v243
    %v288 = vunpack.c.h.b16 %v243
    %v289 = vunpack.c.l.b16 %v244
    %v290 = vunpack.c.h.b16 %v244
    %v291 = vunpack.c.l.b16 %v245
    %v292 = vunpack.c.h.b16 %v245
    %v293 = vunpack.c.l.b16 %v246
    %v294 = vunpack.c.h.b16 %v246
    %v295 = vunpack.c.l.b16 %v247
    %v296 = vunpack.c.h.b16 %v247
    %v297 = vunpack.c.l.b16 %v248
    %v298 = vunpack.c.h.b16 %v248
    %v299 = vunpack.c.l.b16 %v249
    %v300 = vunpack.c.h.b16 %v249
    %v301 = vunpack.c.l.b16 %v250
    %v302 = vunpack.c.h.b16 %v250
    %v303 = vunpack.c.l.b16 %v251
    %v304 = vunpack.c.h.b16 %v251
    %v305 = vunpack.c.l.b16 %v252
    %v306 = vunpack.c.h.b16 %v252
    %v307 = vunpack.c.l.b16 %v253
    %v308 = vunpack.c.h.b16 %v253
    %v309 = vunpack.c.l.b16 %v254
    %v310 = vunpack.c.h.b16 %v254
    %v311 = vunpack.c.l.b16 %v255
    %v312 = vunpack.c.h.b16 %v255
    %v313 = vunpack.c.l.b16 %v256
    %v314 = vunpack.c.h.b16 %v256
    %v315 = vunpack.c.l.b16 %v257
    %v316 = vunpack.c.h.b16 %v257
    %v317 = vunpack.c.l.b16 %v258
    %v318 = vunpack.c.h.b16 %v258
    %v319 = vpack.c.b16 %v289, %v287
    %v320 = vpack.c.b16 %v290, %v288
    %v321 = vpack.c.b16 %v293, %v291
    %v322 = vpack.c.b16 %v294, %v292
    %v323 = vpack.c.b16 %v297, %v295
    %v324 = vpack.c.b16 %v298, %v296
    %v325 = vpack.c.b16 %v301, %v299
    %v326 = vpack.c.b16 %v302, %v300
    %v327 = vpack.c.b16 %v305, %v303
    %v328 = vpack.c.b16 %v306, %v304
    %v329 = vpack.c.b16 %v309, %v307
    %v330 = vpack.c.b16 %v310, %v308
    %v331 = vpack.c.b16 %v313, %v311
    %v332 = vpack.c.b16 %v314, %v312
    %v333 = vpack.c.b16 %v317, %v315
    %v334 = vpack.c.b16 %v318, %v316
    %351 = vmatprep.subr.bf16.mxu0 %v334
    %352 = vmatpush1.bf16.msra.mxu0 %v333
    %353 = vmatprep.subr.bf16.mxu0 %v332
    %354 = vmatpush1.bf16.msra.mxu0 %v331
    %355 = vmatprep.subr.bf16.mxu0 %v330
    %356 = vmatpush1.bf16.msra.mxu0 %v329
    %357 = vmatprep.subr.bf16.mxu0 %v328
    %358 = vmatpush1.bf16.msra.mxu0 %v327
    %359 = vmatprep.subr.bf16.mxu0 %v326
    %360 = vmatpush1.bf16.msra.mxu0 %v325
    %361 = vmatprep.subr.bf16.mxu0 %v324
    %362 = vmatpush1.bf16.msra.mxu0 %v323
    %363 = vmatprep.subr.bf16.mxu0 %v322
    %364 = vmatpush1.bf16.msra.mxu0 %v321
    %365 = vmatprep.subr.bf16.mxu0 %v320
    %366 = vmatpush1.bf16.msra.mxu0 %v319
    %367 = vmatprep.subr.bf16.mxu0 0
    %368 = vmatpush2.bf16.msra.mxu0 0
    %369 = vmatprep.subr.bf16.mxu0 0
    %370 = vmatpush2.bf16.msra.mxu0 0
    %371 = vmatprep.subr.bf16.mxu0 0
    %372 = vmatpush2.bf16.msra.mxu0 0
    %373 = vmatprep.subr.bf16.mxu0 0
    %374 = vmatpush2.bf16.msra.mxu0 0
    %375 = vmatprep.subr.bf16.mxu0 0
    %376 = vmatpush2.bf16.msra.mxu0 0
    %377 = vmatprep.subr.bf16.mxu0 0
    %378 = vmatpush2.bf16.msra.mxu0 0
    %379 = vmatprep.subr.bf16.mxu0 0
    %380 = vmatpush2.bf16.msra.mxu0 0
    %381 = vmatprep.subr.bf16.mxu0 0
    %382 = vmatpush2.bf16.msra.mxu0 0
    %383 = vmatprep.mubr.bf16.mxu0 0
    %384 = vmatmul.mubr.bf16.gmra.mxu0 %v242
    %v385 = vpop.f32.mrf.mxu0
    %v386 = vadd.f32 %v264, %v385
    %v387 = vpop.f32.mrf.mxu0
    %v388 = vadd.f32 %v268, %v387
    %v389 = vpop.f32.mrf.mxu0
    %v390 = vadd.f32 %v264, %v389
    %v391 = vpop.f32.mrf.mxu0
    %v392 = vadd.f32 %v268, %v391
    %393 = vdwg.mxu0
    %v394 = vsub.f32 0.0, %v386
    %v395 = vsub.f32 0.0, %v388
    %v396 = vsub.f32 0.0, %v390
    %v397 = vsub.f32 0.0, %v392
    %v398 = vmul.f32 %v394, 1.442695
    %v399 = vpow.pop %v398
    %v400 = vmul.f32 %v395, 1.442695
    %v401 = vpow.pop %v400
    %v402 = vmul.f32 %v396, 1.442695
    %v403 = vpow.pop %v402
    %v404 = vmul.f32 %v397, 1.442695
    %v405 = vpow.pop %v404
    %v406 = vadd.f32 %v399, 1.0
    %v407 = vadd.f32 %v401, 1.0
    %v408 = vadd.f32 %v403, 1.0
    %v409 = vadd.f32 %v405, 1.0
    %v410 = vrcp.pop %v406
    %v411 = vrcp.pop %v407
    %v412 = vrcp.pop %v408
    %v413 = vrcp.pop %v409
    %414 = vst [vmem:[#allocation11] sm:$0xff] %v410
    %415 = vst [vmem:[#allocation11 + $0x8] sm:$0xff] %v411
    %416 = vst [vmem:[#allocation11 + $0x10] sm:$0xff] %v412
    %417 = vst [vmem:[#allocation11 + $0x18] sm:$0xff] %v413
    // Predicated region
    $region50: #{tpu_custom_call.1} parent=1 // pred_check
      _
    $region51: #{tpu_custom_call.1} parent=1 // pred_check_branch
      %419 = sbr.rel (0) target = $region53
    $region52: #{tpu_custom_call.1} parent=1 // pred_region
      %s421 = ssub.s32 512, 512
      %422 = vsyncadd [#allocation4], %s421
      %s423 = sshll.u32 [#allocation11], 4
      %s424 = int_to_ptr.vmem [resolvable:$true] %s423
      %429 = dma.vmem_to_hbm [thread:$0]  %s424, 512, %s7, [#allocation4], 256, 256, 16
    $region53: #{tpu_custom_call.1} parent=1 // pred_fallthru
      _
    // Predicated region
    $region54: #{tpu_custom_call.1} parent=1 // pred_check
      _
    $region55: #{tpu_custom_call.1} parent=1 // pred_check_branch
      %431 = sbr.rel (0) target = $region57
    $region56: #{tpu_custom_call.1} parent=1 // pred_region
      %432 = dma.done [#allocation4], 512
    $region57: #{tpu_custom_call.1} parent=1 // pred_fallthru
      _
    %433 = vsyncpa [#allocation3], 1
    %434 = vsyncpa [#allocation6], 1
    %435 = vsyncpa [#allocation9], 1
    %436 = vsyncpa [#allocation4], 1

// kernel: tpu_custom_call.1
$region0: #{tpu_custom_call.1}
  #allocation0 [shape = 'u32[]', space=smem, size = 0x4, offset = 0x4, fixed_abs, tag = 'smem constant byte address 0x4 - core index']
  #allocation1 [shape = 'u32[144,128]{1,0:T(1,128)}', space=vmem, size = 0x12000, scoped, tag = 'internal scratch']
  %s0 = inlined_call_operand.hbm [shape: bf16[16,32], index: 0, kind: input, shape index: {}]
  %s1 = inlined_call_operand.hbm [shape: bf16[16,32], index: 1, kind: input, shape index: {}]
  %s2 = inlined_call_operand.hbm [shape: bf16[32,128], index: 2, kind: input, shape index: {}]
  %s3 = inlined_call_operand.hbm [shape: bf16[32,128], index: 3, kind: input, shape index: {}]
  %s4 = inlined_call_operand.vmem [shape: f32[1,128], index: 4, kind: input, shape index: {}]
  %s5 = inlined_call_operand.hbm [shape: bf16[128,256], index: 5, kind: input, shape index: {}]
  %s6 = inlined_call_operand.vmem [shape: f32[1,256], index: 6, kind: input, shape index: {}]
  %s7 = inlined_call_operand.hbm [shape: f32[16,256], index: 7, kind: output, shape index: {}]
  %s8 = sld [smem:[#allocation0]]
  $region58: #{tpu_custom_call.1} parent=0
    _
  %s10 = ssub.s32 1, %s8
  %s11 = scalar_select 0, %s10, %s8
  $region1: #{tpu_custom_call.1} parent=0
    #allocation2 [shape = 'u8[4096]{0}', space=vmem, size = 0x1000, scoped, tag = 'input window, operand 0, single buffered']
    #allocation3 [shape = 's32[1]{0}', space=sflag, size = 0x4, scoped, tag = 'scoped memory for tpu_custom_call.1']
    #allocation4 [shape = 's32[1]{0}', space=sflag, size = 0x4, scoped, tag = 'scoped memory for tpu_custom_call.1']
    #allocation5 [shape = 'u8[4096]{0}', space=vmem, size = 0x1000, scoped, tag = 'input window, operand 1, single buffered']
    #allocation6 [shape = 's32[1]{0}', space=sflag, size = 0x4, scoped, tag = 'scoped memory for tpu_custom_call.1']
    #allocation7 [shape = 'u8[8192]{0}', space=vmem, size = 0x2000, scoped, tag = 'input window, operand 2, single buffered']
    #allocation8 [shape = 'u8[8192]{0}', space=vmem, size = 0x2000, scoped, tag = 'input window, operand 3, single buffered']
    #allocation9 [shape = 's32[1]{0}', space=sflag, size = 0x4, scoped, tag = 'scoped memory for tpu_custom_call.1']
    #allocation10 [shape = 'u8[65536]{0}', space=vmem, size = 0x10000, scoped, tag = 'input window, operand 5, single buffered']
    #allocation11 [shape = 'u8[16384]{0}', space=vmem, size = 0x4000, scoped, tag = 'output window, operand 0, single buffered']
    %12 = vsyncpa [#allocation3], 0
    %13 = vsyncpa [#allocation6], 0
    %14 = vsyncpa [#allocation9], 0
    %15 = vsyncpa [#allocation4], 0
    // Predicated region
    $region2: #{tpu_custom_call.1} parent=1 // pred_check
      _
    $region3: #{tpu_custom_call.1} parent=1 // pred_check_branch
      %17 = sbr.rel (0) target = $region5
    $region4: #{tpu_custom_call.1} parent=1 // pred_region
      %s19 = ssub.s32 128, 128
      %20 = vsyncadd [#allocation3], %s19
      %s21 = sshll.u32 [#allocation2], 4
      %s22 = int_to_ptr.vmem [resolvable:$true] %s21
      %27 = dma.hbm_to_vmem [thread:$0]  %s0, 128, %s22, [#allocation3], 64, 64, 4
    $region5: #{tpu_custom_call.1} parent=1 // pred_fallthru
      _
    // Predicated region
    $region6: #{tpu_custom_call.1} parent=1 // pred_check
      _
    $region7: #{tpu_custom_call.1} parent=1 // pred_check_branch
      %29 = sbr.rel (0) target = $region9
    $region8: #{tpu_custom_call.1} parent=1 // pred_region
      %s31 = ssub.s32 128, 128
      %32 = vsyncadd [#allocation6], %s31
      %s33 = sshll.u32 [#allocation5], 4
      %s34 = int_to_ptr.vmem [resolvable:$true] %s33
      %39 = dma.hbm_to_vmem [thread:$0]  %s1, 128, %s34, [#allocation6], 64, 64, 4
    $region9: #{tpu_custom_call.1} parent=1 // pred_fallthru
      _
    // Predicated region
    $region10: #{tpu_custom_call.1} parent=1 // pred_check
      _
    $region11: #{tpu_custom_call.1} parent=1 // pred_check_branch
      %41 = sbr.rel (0) target = $region13
    $region12: #{tpu_custom_call.1} parent=1 // pred_region
      %s43 = ssub.s32 256, 256
      %44 = vsyncadd [#allocation6], %s43
      %s45 = sshll.u32 [#allocation7], 4
      %s46 = int_to_ptr.vmem [resolvable:$true] %s45
      %51 = dma.hbm_to_vmem [thread:$0]  %s2, 256, %s46, [#allocation6], 64, 64, 4
    $region13: #{tpu_custom_call.1} parent=1 // pred_fallthru
      _
    // Predicated region
    $region14: #{tpu_custom_call.1} parent=1 // pred_check
      _
    $region15: #{tpu_custom_call.1} parent=1 // pred_check_branch
      %53 = sbr.rel (0) target = $region17
    $region16: #{tpu_custom_call.1} parent=1 // pred_region
      %s55 = ssub.s32 256, 256
      %56 = vsyncadd [#allocation9], %s55
      %s57 = sshll.u32 [#allocation8], 4
      %s58 = int_to_ptr.vmem [resolvable:$true] %s57
      %63 = dma.hbm_to_vmem [thread:$0]  %s3, 256, %s58, [#allocation9], 64, 64, 4
    $region17: #{tpu_custom_call.1} parent=1 // pred_fallthru
      _
    // Predicated region
    $region18: #{tpu_custom_call.1} parent=1 // pred_check
      _
    $region19: #{tpu_custom_call.1} parent=1 // pred_check_branch
      %65 = sbr.rel (0) target = $region21
    $region20: #{tpu_custom_call.1} parent=1 // pred_region
      _
    $region21: #{tpu_custom_call.1} parent=1 // pred_fallthru
      _
    // Predicated region
    $region22: #{tpu_custom_call.1} parent=1 // pred_check
      _
    $region23: #{tpu_custom_call.1} parent=1 // pred_check_branch
      %67 = sbr.rel (0) target = $region25
    $region24: #{tpu_custom_call.1} parent=1 // pred_region
      %s69 = ssub.s32 2048, 2048
      %70 = vsyncadd [#allocation9], %s69
      %s71 = sshll.u32 [#allocation10], 4
      %s72 = int_to_ptr.vmem [resolvable:$true] %s71
      %77 = dma.hbm_to_vmem [thread:$0]  %s5, 2048, %s72, [#allocation9], 128, 128, 8
    $region25: #{tpu_custom_call.1} parent=1 // pred_fallthru
      _
    // Predicated region
    $region26: #{tpu_custom_call.1} parent=1 // pred_check
      _
    $region27: #{tpu_custom_call.1} parent=1 // pred_check_branch
      %79 = sbr.rel (0) target = $region29
    $region28: #{tpu_custom_call.1} parent=1 // pred_region
      _
    $region29: #{tpu_custom_call.1} parent=1 // pred_fallthru
      _
    // Predicated region
    $region30: #{tpu_custom_call.1} parent=1 // pred_check
      _
    $region31: #{tpu_custom_call.1} parent=1 // pred_check_branch
      %81 = sbr.rel (0) target = $region33
    $region32: #{tpu_custom_call.1} parent=1 // pred_region
      %82 = dma.done [#allocation3], 128
    $region33: #{tpu_custom_call.1} parent=1 // pred_fallthru
      _
    // Predicated region
    $region34: #{tpu_custom_call.1} parent=1 // pred_check
      _
    $region35: #{tpu_custom_call.1} parent=1 // pred_check_branch
      %84 = sbr.rel (0) target = $region37
    $region36: #{tpu_custom_call.1} parent=1 // pred_region
      %85 = dma.done [#allocation6], 128
    $region37: #{tpu_custom_call.1} parent=1 // pred_fallthru
      _
    // Predicated region
    $region38: #{tpu_custom_call.1} parent=1 // pred_check
      _
    $region39: #{tpu_custom_call.1} parent=1 // pred_check_branch
      %87 = sbr.rel (0) target = $region41
    $region40: #{tpu_custom_call.1} parent=1 // pred_region
      %88 = dma.done [#allocation6], 256
    $region41: #{tpu_custom_call.1} parent=1 // pred_fallthru
      _
    // Predicated region
    $region42: #{tpu_custom_call.1} parent=1 // pred_check
      _
    $region43: #{tpu_custom_call.1} parent=1 // pred_check_branch
      %90 = sbr.rel (0) target = $region45
    $region44: #{tpu_custom_call.1} parent=1 // pred_region
      %91 = dma.done [#allocation9], 256
    $region45: #{tpu_custom_call.1} parent=1 // pred_fallthru
      _
    // Predicated region
    $region46: #{tpu_custom_call.1} parent=1 // pred_check
      _
    $region47: #{tpu_custom_call.1} parent=1 // pred_check_branch
      %93 = sbr.rel (0) target = $region49
    $region48: #{tpu_custom_call.1} parent=1 // pred_region
      %94 = dma.done [#allocation9], 2048
    $region49: #{tpu_custom_call.1} parent=1 // pred_fallthru
      _
    %v96 = vld [vmem:[#allocation2] sm:$0xf]
    %v97 = vld [vmem:[#allocation2 + $0x4] sm:$0xf]
    %v98 = vld [vmem:[#allocation7] sm:$0xf]
    %v99 = vld [vmem:[#allocation7 + $0x4] sm:$0xf]
    %v100 = vld [vmem:[#allocation7 + $0x8] sm:$0xf]
    %v101 = vld [vmem:[#allocation7 + $0xc] sm:$0xf]
    %v102 = vld [vmem:[#allocation5] sm:$0xf]
    %v103 = vld [vmem:[#allocation5 + $0x4] sm:$0xf]
    %v104 = vld [vmem:[#allocation8] sm:$0xf]
    %v105 = vld [vmem:[#allocation8 + $0x4] sm:$0xf]
    %v106 = vld [vmem:[#allocation8 + $0x8] sm:$0xf]
    %v107 = vld [vmem:[#allocation8 + $0xc] sm:$0xf]
    %v110 = vunpack.c.l.b16 %v102
    %v111 = vunpack.c.l.b16 %v103
    %v112 = vpack.c.b16 %v111, %v110
    %v117 = vunpack.c.l.b16 %v104
    %v118 = vunpack.c.l.b16 %v105
    %v119 = vunpack.c.l.b16 %v106
    %v120 = vunpack.c.l.b16 %v107
    %v121 = vpack.c.b16 %v118, %v117
    %v122 = vpack.c.b16 %v120, %v119
    %vm125 = vcmask 261120
    %v127 = vsel %vm125, %v112, 0
    %129 = vmatprep.subr.bf16.mxu0 0
    %130 = vmatpush1.bf16.msra.mxu0 0
    %131 = vmatprep.subr.bf16.mxu0 0
    %132 = vmatpush1.bf16.msra.mxu0 0
    %133 = vmatprep.subr.bf16.mxu0 0
    %134 = vmatpush1.bf16.msra.mxu0 0
    %135 = vmatprep.subr.bf16.mxu0 0
    %136 = vmatpush1.bf16.msra.mxu0 0
    %137 = vmatprep.subr.bf16.mxu0 0
    %138 = vmatpush1.bf16.msra.mxu0 0
    %139 = vmatprep.subr.bf16.mxu0 0
    %140 = vmatpush1.bf16.msra.mxu0 0
    %141 = vmatprep.subr.bf16.mxu0 0
    %142 = vmatpush1.bf16.msra.mxu0 %v122
    %143 = vmatprep.subr.bf16.mxu0 0
    %144 = vmatpush1.bf16.msra.mxu0 %v121
    %145 = vmatprep.subr.bf16.mxu0 0
    %146 = vmatpush2.bf16.msra.mxu0 0
    %147 = vmatprep.subr.bf16.mxu0 0
    %148 = vmatpush2.bf16.msra.mxu0 0
    %149 = vmatprep.subr.bf16.mxu0 0
    %150 = vmatpush2.bf16.msra.mxu0 0
    %151 = vmatprep.subr.bf16.mxu0 0
    %152 = vmatpush2.bf16.msra.mxu0 0
    %153 = vmatprep.subr.bf16.mxu0 0
    %154 = vmatpush2.bf16.msra.mxu0 0
    %155 = vmatprep.subr.bf16.mxu0 0
    %156 = vmatpush2.bf16.msra.mxu0 0
    %157 = vmatprep.subr.bf16.mxu0 0
    %158 = vmatpush2.bf16.msra.mxu0 0
    %159 = vmatprep.subr.bf16.mxu0 0
    %160 = vmatpush2.bf16.msra.mxu0 0
    %161 = vmatprep.mubr.bf16.mxu0 0
    %162 = vmatmul.mubr.bf16.gmra.mxu0 %v127
    %v163 = vpop.f32.mrf.mxu0
    %v164 = vadd.f32 0.0, %v163
    %v165 = vpop.f32.mrf.mxu0
    %v166 = vpop.f32.mrf.mxu0
    %v167 = vadd.f32 0.0, %v166
    %v168 = vpop.f32.mrf.mxu0
    %169 = vdwg.mxu0
    %v172 = vunpack.c.l.b16 %v96
    %v173 = vunpack.c.l.b16 %v97
    %v174 = vpack.c.b16 %v173, %v172
    %v179 = vunpack.c.l.b16 %v98
    %v180 = vunpack.c.l.b16 %v99
    %v181 = vunpack.c.l.b16 %v100
    %v182 = vunpack.c.l.b16 %v101
    %v183 = vpack.c.b16 %v180, %v179
    %v184 = vpack.c.b16 %v182, %v181
    %v188 = vsel %vm125, %v174, 0
    %190 = vmatprep.subr.bf16.mxu0 0
    %191 = vmatpush1.bf16.msra.mxu0 0
    %192 = vmatprep.subr.bf16.mxu0 0
    %193 = vmatpush1.bf16.msra.mxu0 0
    %194 = vmatprep.subr.bf16.mxu0 0
    %195 = vmatpush1.bf16.msra.mxu0 0
    %196 = vmatprep.subr.bf16.mxu0 0
    %197 = vmatpush1.bf16.msra.mxu0 0
    %198 = vmatprep.subr.bf16.mxu0 0
    %199 = vmatpush1.bf16.msra.mxu0 0
    %200 = vmatprep.subr.bf16.mxu0 0
    %201 = vmatpush1.bf16.msra.mxu0 0
    %202 = vmatprep.subr.bf16.mxu0 0
    %203 = vmatpush1.bf16.msra.mxu0 %v184
    %204 = vmatprep.subr.bf16.mxu0 0
    %205 = vmatpush1.bf16.msra.mxu0 %v183
    %206 = vmatprep.subr.bf16.mxu0 0
    %207 = vmatpush2.bf16.msra.mxu0 0
    %208 = vmatprep.subr.bf16.mxu0 0
    %209 = vmatpush2.bf16.msra.mxu0 0
    %210 = vmatprep.subr.bf16.mxu0 0
    %211 = vmatpush2.bf16.msra.mxu0 0
    %212 = vmatprep.subr.bf16.mxu0 0
    %213 = vmatpush2.bf16.msra.mxu0 0
    %214 = vmatprep.subr.bf16.mxu0 0
    %215 = vmatpush2.bf16.msra.mxu0 0
    %216 = vmatprep.subr.bf16.mxu0 0
    %217 = vmatpush2.bf16.msra.mxu0 0
    %218 = vmatprep.subr.bf16.mxu0 0
    %219 = vmatpush2.bf16.msra.mxu0 0
    %220 = vmatprep.subr.bf16.mxu0 0
    %221 = vmatpush2.bf16.msra.mxu0 0
    %222 = vmatprep.mubr.bf16.mxu0 0
    %223 = vmatmul.mubr.bf16.gmra.mxu0 %v188
    %v224 = vpop.f32.mrf.mxu0
    %v225 = vadd.f32 %v164, %v224
    %v226 = vpop.f32.mrf.mxu0
    %v227 = vpop.f32.mrf.mxu0
    %v228 = vadd.f32 %v167, %v227
    %v229 = vpop.f32.mrf.mxu0
    %230 = vdwg.mxu0
    %v231 = vld [vmem:[%s4] sm:$0x1]
    %v233 = vlaneseq
    %v234 = vshrl.u32 %v233, 7
    %v235 = vsub.s32 0, %v234
    %v236 = vrot.slane %v231, %v235
    %v238 = vadd.f32 %v225, %v236
    %v239 = vadd.f32 %v228, %v236
    %v240 = vmax.f32 %v238, 0.0
    %v241 = vmax.f32 %v239, 0.0
    %v242 = vpack.c.bf16 %v241, %v240
    %v243 = vld [vmem:[#allocation10] sm:$0xff]
    %v244 = vld [vmem:[#allocation10 + $0x8] sm:$0xff]
    %v245 = vld [vmem:[#allocation10 + $0x10] sm:$0xff]
    %v246 = vld [vmem:[#allocation10 + $0x18] sm:$0xff]
    %v247 = vld [vmem:[#allocation10 + $0x20] sm:$0xff]
    %v248 = vld [vmem:[#allocation10 + $0x28] sm:$0xff]
    %v249 = vld [vmem:[#allocation10 + $0x30] sm:$0xff]
    %v250 = vld [vmem:[#allocation10 + $0x38] sm:$0xff]
    %v251 = vld [vmem:[#allocation10 + $0x40] sm:$0xff]
    %v252 = vld [vmem:[#allocation10 + $0x48] sm:$0xff]
    %v253 = vld [vmem:[#allocation10 + $0x50] sm:$0xff]
    %v254 = vld [vmem:[#allocation10 + $0x58] sm:$0xff]
    %v255 = vld [vmem:[#allocation10 + $0x60] sm:$0xff]
    %v256 = vld [vmem:[#allocation10 + $0x68] sm:$0xff]
    %v257 = vld [vmem:[#allocation10 + $0x70] sm:$0xff]
    %v258 = vld [vmem:[#allocation10 + $0x78] sm:$0xff]
    %v259 = vld [vmem:[%s6] sm:$0x3]
    %v261 = vlaneseq
    %v262 = vshrl.u32 %v261, 7
    %v263 = vsub.s32 0, %v262
    %v264 = vrot.slane %v259, %v263
    %v265 = vlaneseq
    %v266 = vshrl.u32 %v265, 7
    %v267 = vsub.s32 1, %v266
    %v268 = vrot.slane %v259, %v267
    %v287 = vunpack.c.l.b16 %v243
    %v288 = vunpack.c.h.b16 %v243
    %v289 = vunpack.c.l.b16 %v244
    %v290 = vunpack.c.h.b16 %v244
    %v291 = vunpack.c.l.b16 %v245
    %v292 = vunpack.c.h.b16 %v245
    %v293 = vunpack.c.l.b16 %v246
    %v294 = vunpack.c.h.b16 %v246
    %v295 = vunpack.c.l.b16 %v247
    %v296 = vunpack.c.h.b16 %v247
    %v297 = vunpack.c.l.b16 %v248
    %v298 = vunpack.c.h.b16 %v248
    %v299 = vunpack.c.l.b16 %v249
    %v300 = vunpack.c.h.b16 %v249
    %v301 = vunpack.c.l.b16 %v250
    %v302 = vunpack.c.h.b16 %v250
    %v303 = vunpack.c.l.b16 %v251
    %v304 = vunpack.c.h.b16 %v251
    %v305 = vunpack.c.l.b16 %v252
    %v306 = vunpack.c.h.b16 %v252
    %v307 = vunpack.c.l.b16 %v253
    %v308 = vunpack.c.h.b16 %v253
    %v309 = vunpack.c.l.b16 %v254
    %v310 = vunpack.c.h.b16 %v254
    %v311 = vunpack.c.l.b16 %v255
    %v312 = vunpack.c.h.b16 %v255
    %v313 = vunpack.c.l.b16 %v256
    %v314 = vunpack.c.h.b16 %v256
    %v315 = vunpack.c.l.b16 %v257
    %v316 = vunpack.c.h.b16 %v257
    %v317 = vunpack.c.l.b16 %v258
    %v318 = vunpack.c.h.b16 %v258
    %v319 = vpack.c.b16 %v289, %v287
    %v320 = vpack.c.b16 %v290, %v288
    %v321 = vpack.c.b16 %v293, %v291
    %v322 = vpack.c.b16 %v294, %v292
    %v323 = vpack.c.b16 %v297, %v295
    %v324 = vpack.c.b16 %v298, %v296
    %v325 = vpack.c.b16 %v301, %v299
    %v326 = vpack.c.b16 %v302, %v300
    %v327 = vpack.c.b16 %v305, %v303
    %v328 = vpack.c.b16 %v306, %v304
    %v329 = vpack.c.b16 %v309, %v307
    %v330 = vpack.c.b16 %v310, %v308
    %v331 = vpack.c.b16 %v313, %v311
    %v332 = vpack.c.b16 %v314, %v312
    %v333 = vpack.c.b16 %v317, %v315
    %v334 = vpack.c.b16 %v318, %v316
    %351 = vmatprep.subr.bf16.mxu0 %v334
    %352 = vmatpush1.bf16.msra.mxu0 %v333
    %353 = vmatprep.subr.bf16.mxu0 %v332
    %354 = vmatpush1.bf16.msra.mxu0 %v331
    %355 = vmatprep.subr.bf16.mxu0 %v330
    %356 = vmatpush1.bf16.msra.mxu0 %v329
    %357 = vmatprep.subr.bf16.mxu0 %v328
    %358 = vmatpush1.bf16.msra.mxu0 %v327
    %359 = vmatprep.subr.bf16.mxu0 %v326
    %360 = vmatpush1.bf16.msra.mxu0 %v325
    %361 = vmatprep.subr.bf16.mxu0 %v324
    %362 = vmatpush1.bf16.msra.mxu0 %v323
    %363 = vmatprep.subr.bf16.mxu0 %v322
    %364 = vmatpush1.bf16.msra.mxu0 %v321
    %365 = vmatprep.subr.bf16.mxu0 %v320
    %366 = vmatpush1.bf16.msra.mxu0 %v319
    %367 = vmatprep.subr.bf16.mxu0 0
    %368 = vmatpush2.bf16.msra.mxu0 0
    %369 = vmatprep.subr.bf16.mxu0 0
    %370 = vmatpush2.bf16.msra.mxu0 0
    %371 = vmatprep.subr.bf16.mxu0 0
    %372 = vmatpush2.bf16.msra.mxu0 0
    %373 = vmatprep.subr.bf16.mxu0 0
    %374 = vmatpush2.bf16.msra.mxu0 0
    %375 = vmatprep.subr.bf16.mxu0 0
    %376 = vmatpush2.bf16.msra.mxu0 0
    %377 = vmatprep.subr.bf16.mxu0 0
    %378 = vmatpush2.bf16.msra.mxu0 0
    %379 = vmatprep.subr.bf16.mxu0 0
    %380 = vmatpush2.bf16.msra.mxu0 0
    %381 = vmatprep.subr.bf16.mxu0 0
    %382 = vmatpush2.bf16.msra.mxu0 0
    %383 = vmatprep.mubr.bf16.mxu0 0
    %384 = vmatmul.mubr.bf16.gmra.mxu0 %v242
    %v385 = vpop.f32.mrf.mxu0
    %v386 = vadd.f32 %v264, %v385
    %v387 = vpop.f32.mrf.mxu0
    %v388 = vadd.f32 %v268, %v387
    %v389 = vpop.f32.mrf.mxu0
    %v390 = vadd.f32 %v264, %v389
    %v391 = vpop.f32.mrf.mxu0
    %v392 = vadd.f32 %v268, %v391
    %393 = vdwg.mxu0
    %v394 = vsub.f32 0.0, %v386
    %v395 = vsub.f32 0.0, %v388
    %v396 = vsub.f32 0.0, %v390
    %v397 = vsub.f32 0.0, %v392
    %v398 = vmul.f32 %v394, 1.442695
    %v399 = vpow.pop %v398
    %v400 = vmul.f32 %v395, 1.442695
    %v401 = vpow.pop %v400
    %v402 = vmul.f32 %v396, 1.442695
    %v403 = vpow.pop %v402
    %v404 = vmul.f32 %v397, 1.442695
    %v405 = vpow.pop %v404
    %v406 = vadd.f32 %v399, 1.0
    %v407 = vadd.f32 %v401, 1.0
    %v408 = vadd.f32 %v403, 1.0
    %v409 = vadd.f32 %v405, 1.0
    %v410 = vrcp.pop %v406
    %v411 = vrcp.pop %v407
    %v412 = vrcp.pop %v408
    %v413 = vrcp.pop %v409
    %414 = vst [vmem:[#allocation11] sm:$0xff] %v410
    %415 = vst [vmem:[#allocation11 + $0x8] sm:$0xff] %v411
    %416 = vst [vmem:[#allocation11 + $0x10] sm:$0xff] %v412
    %417 = vst [vmem:[#allocation11 + $0x18] sm:$0xff] %v413
    // Predicated region
    $region50: #{tpu_custom_call.1} parent=1 // pred_check
      _
    $region51: #{tpu_custom_call.1} parent=1 // pred_check_branch
      %419 = sbr.rel (0) target = $region53
    $region52: #{tpu_custom_call.1} parent=1 // pred_region
      %s421 = ssub.s32 512, 512
      %422 = vsyncadd [#allocation4], %s421
      %s423 = sshll.u32 [#allocation11], 4
      %s424 = int_to_ptr.vmem [resolvable:$true] %s423
      %429 = dma.vmem_to_hbm [thread:$0]  %s424, 512, %s7, [#allocation4], 256, 256, 16
    $region53: #{tpu_custom_call.1} parent=1 // pred_fallthru
      _
    // Predicated region
    $region54: #{tpu_custom_call.1} parent=1 // pred_check
      _
    $region55: #{tpu_custom_call.1} parent=1 // pred_check_branch
      %431 = sbr.rel (0) target = $region57
    $region56: #{tpu_custom_call.1} parent=1 // pred_region
      %432 = dma.done [#allocation4], 512
    $region57: #{tpu_custom_call.1} parent=1 // pred_fallthru
      _
    %433 = vsyncpa [#allocation3], 1
    %434 = vsyncpa [#allocation6], 1
    %435 = vsyncpa [#allocation9], 1
    %436 = vsyncpa [#allocation4], 1

</llo_original>
